<compile_context>
chip_gen: v7x
topology: tpu7x:2x2x1
jax: 0.10.0
libtpu: 0.0.40
codegen_flags: <defaults>
</compile_context>

<pallas_src>
import functools

import jax
import jax.numpy as jnp
from jax.experimental import pallas as pl
from jax.experimental.pallas import tpu as pltpu

ALPHA = 0.1
BETA = 0.01

_LANES = 128
_MAX_TILE_ROWS = 4096   # 2 MiB f32 tile -> 4 MiB double-buffered input
_MAX_CHUNK_ROWS = 64    # 8 f32 vregs per fori_loop iteration


def _cdiv(a, b):
    return -(-a // b)


def _sublane_rows(dtype):
    """Minimum legal sublane multiple for a packed dtype (8/16/32)."""
    itemsize = jnp.dtype(dtype).itemsize
    return 8 * max(1, 4 // itemsize)


def _symbiont_kernel(x_ref, mean_ref, std_ref, sum_acc, sq_acc,
                     *, n_elems, n_rows, tile_rows, chunk_rows):
    """Single-pass streaming (sum, sumsq) reduction -> mean / unbiased std.

    x_ref:            (tile_rows, 128) tile of the flattened input slab
    mean_ref/std_ref: (1, 1) SMEM scalar outputs (written on the last step)
    sum_acc/sq_acc:   (8, 128) f32 VMEM accumulators resident across the grid
    """
    step = pl.program_id(0)
    last = pl.num_programs(0) - 1
    n_chunks = tile_rows // chunk_rows

    @pl.when(step == 0)
    def _init():
        sum_acc[...] = jnp.zeros_like(sum_acc)
        sq_acc[...] = jnp.zeros_like(sq_acc)

    def _accumulate(masked):
        zero = jnp.zeros((chunk_rows, _LANES), jnp.float32)
        row_iota = jax.lax.broadcasted_iota(
            jnp.int32, (chunk_rows, _LANES), 0)

        def body(c, carry):
            s, q = carry
            off = pl.multiple_of(c * chunk_rows, chunk_rows)
            chunk = x_ref[pl.ds(off, chunk_rows), :].astype(jnp.float32)
            if masked:
                # Rows at/after n_rows only exist in the (unspecified) edge-
                # block region of the VMEM buffer; zero them *before* both the
                # sum and the square.
                limit = n_rows - step * tile_rows - c * chunk_rows
                chunk = jnp.where(row_iota < limit, chunk,
                                  jnp.zeros_like(chunk))
            return s + chunk, q + chunk * chunk

        s, q = jax.lax.fori_loop(0, n_chunks, body, (zero, zero))
        # Collapse the vreg-resident partials into the (8, 128) accumulators:
        # one pair of VMEM read-modify-writes per *tile* (stores amortized).
        sum_acc[...] += s.reshape(chunk_rows // 8, 8, _LANES).sum(axis=0)
        sq_acc[...] += q.reshape(chunk_rows // 8, 8, _LANES).sum(axis=0)

    @pl.when(step != last)
    def _bulk():
        _accumulate(masked=False)

    @pl.when(step == last)
    def _tail_and_finalize():
        _accumulate(masked=True)

        n = jnp.float32(n_elems)
        s = jnp.sum(sum_acc[...])   # single XLU full-reduce, last step only
        q = jnp.sum(sq_acc[...])
        mean = s / n
        # torch.std default: unbiased (Bessel's correction, divide by N-1).
        # Clamp guards tiny negative values from f32 rounding.
        # TODO(synk): shifted / Welford-style per-tile combine would avoid
        # cancellation in (q - s*mean) when |mean| >> std or n is huge.
        var = jnp.maximum((q - s * mean) / (n - jnp.float32(1.0)),
                          jnp.float32(0.0))
        std = jnp.sqrt(var)
        mean_ref[0, 0] = mean
        std_ref[0, 0] = std


def symbiont_bridge(external_phase, i_param, h_param, alpha=ALPHA, beta=BETA):
    """Functional equivalent of SymbiontBridge.forward.

    Returns (new_i, new_h, delta_i) with delta_i == alpha * mean(external_phase).
    """
    total = int(external_phase.size)
    sub = _sublane_rows(external_phase.dtype)

    # Lane-dense view of the input.  For lane-aligned sizes (the common case)
    # this is a zero-cost reshape -- no full-tensor padding copy.  Only a
    # ragged lane tail or a tiny (< one sublane tile) input pays for a pad.
    x_flat = external_phase.reshape(-1)          # keep native dtype
    n_rows = max(_cdiv(total, _LANES), sub)
    pad = n_rows * _LANES - total
    if pad:
        # TODO(synk): for huge non-lane-aligned inputs, split into an aligned
        # bulk + tiny tail input instead of padding the whole flat tensor.
        x_flat = jnp.pad(x_flat, (0, pad))
    x2d = x_flat.reshape(n_rows, _LANES)

    # Largest legal tile (multiple of the packed-dtype sublane tile), capped
    # at ~2 MiB f32: double-buffered input (4 MiB) + 8 KiB accumulators stays
    # far below the scoped-VMEM default on every TPU generation (incl. v7x).
    tile_rows = min(_MAX_TILE_ROWS, (n_rows // sub) * sub)
    n_tiles = _cdiv(n_rows, tile_rows)

    chunk_rows = sub
    while (chunk_rows * 2 <= min(_MAX_CHUNK_ROWS, tile_rows)
           and tile_rows % (chunk_rows * 2) == 0):
        chunk_rows *= 2

    kernel = functools.partial(
        _symbiont_kernel, n_elems=total, n_rows=n_rows,
        tile_rows=tile_rows, chunk_rows=chunk_rows)

    # TODO(synk): on v7x, shard this streaming axis across the 2 TensorCores
    # (leading "parallel" axis + per-core partial outputs combined in the
    # wrapper) for ~2x HBM bandwidth; single-core is optimal on v5e/v6e.
    grid_spec = pltpu.PrefetchScalarGridSpec(
        num_scalar_prefetch=0,
        grid=(n_tiles,),
        in_specs=[pl.BlockSpec((tile_rows, _LANES), lambda r: (r, 0))],
        out_specs=(
            pl.BlockSpec(memory_space=pltpu.MemorySpace.SMEM),
            pl.BlockSpec(memory_space=pltpu.MemorySpace.SMEM),
        ),
        scratch_shapes=[
            pltpu.VMEM((8, _LANES), jnp.float32),
            pltpu.VMEM((8, _LANES), jnp.float32),
        ],
    )

    mean2, std2 = pl.pallas_call(
        kernel,
        out_shape=(
            jax.ShapeDtypeStruct((1, 1), jnp.float32),
            jax.ShapeDtypeStruct((1, 1), jnp.float32),
        ),
        grid_spec=grid_spec,
        compiler_params=pltpu.CompilerParams(
            dimension_semantics=("arbitrary",),
            vmem_limit_bytes=32 * 1024 * 1024,
        ),
    )(x2d)

    mean = mean2[0, 0]
    std = std2[0, 0]
    delta_i = jnp.float32(alpha) * mean
    # O(hidden) broadcast adds in plain JAX (review: keeps the kernel a pure
    # streaming reduction; no per-step sub-lane-width parameter blocks).
    new_i = (i_param.astype(jnp.float32) + delta_i).astype(i_param.dtype)
    new_h = (h_param.astype(jnp.float32)
             + jnp.float32(beta) * std).astype(h_param.dtype)
    return new_i, new_h, delta_i


if __name__ == "__main__":
    key = jax.random.PRNGKey(0)
    k_x, k_i, k_h = jax.random.split(key, 3)

    # Small shapes consistent with the module: external_phase is NCHW,
    # main.i / main.h are hidden-sized parameter buffers of the wrapped layer.
    external_phase = jax.random.normal(k_x, (2, 4, 16, 16), dtype=jnp.float32)
    i_param = jax.random.normal(k_i, (32,), dtype=jnp.float32)
    h_param = jax.random.normal(k_h, (32,), dtype=jnp.float32)

    new_i, new_h, delta_i = symbiont_bridge(external_phase, i_param, h_param)
    jax.block_until_ready((new_i, new_h, delta_i))

    # Reference check in plain JAX (mean + unbiased std).
    mean_ref = jnp.mean(external_phase)
    std_ref = jnp.std(external_phase, ddof=1)
    exp_i = i_param + ALPHA * mean_ref
    exp_h = h_param + BETA * std_ref
    assert jnp.allclose(new_i, exp_i, atol=1e-5), "i update mismatch"
    assert jnp.allclose(new_h, exp_h, atol=1e-5), "h update mismatch"
    assert jnp.allclose(delta_i, ALPHA * mean_ref, atol=1e-5), "delta_i mismatch"

    print(f"[Symbiont] Modulated i/h with ext_phase: Δi={float(delta_i):.4f}")
    print("KERNEL_OK")
</pallas_src>

<mosaic_0001>
module attributes {stable_mosaic.version = 11 : i64} {
  func.func @_symbiont_kernel(%arg0: i32, %arg1: memref<16x128xf32, #tpu.memory_space<vmem>>, %arg2: memref<1x1xf32, #tpu.memory_space<smem>>, %arg3: memref<1x1xf32, #tpu.memory_space<smem>>, %arg4: memref<8x128xf32, #tpu.memory_space<vmem>>, %arg5: memref<8x128xf32, #tpu.memory_space<vmem>>) attributes {dimension_semantics = [#tpu.dimension_semantics<arbitrary>], iteration_bounds = array<i64: 1>, scalar_prefetch = 0 : i64, scratch_operands = 2 : i64, tpu.core_type = #tpu.core_type<tc>, window_params = [{transform_indices = @transform_0, window_bounds = array<i64: 16, 128>}, {transform_indices = @transform_1, window_bounds = array<i64: 1, 1>}, {transform_indices = @transform_2, window_bounds = array<i64: 1, 1>}]} {
    %c0_i32 = arith.constant 0 : i32
    %0 = arith.cmpi eq, %arg0, %c0_i32 : i32
    %1 = arith.extui %0 : i1 to i32
    %c0_i32_0 = arith.constant 0 : i32
    %2 = arith.cmpi ne, %1, %c0_i32_0 : i32
    scf.if %2 {
      %cst = arith.constant 0.000000e+00 : f32
      %9 = vector.broadcast %cst : f32 to vector<8x128xf32>
      %c0 = arith.constant 0 : index
      %c0_5 = arith.constant 0 : index
      %10 = vector.load %arg4[%c0, %c0_5] : memref<8x128xf32, #tpu.memory_space<vmem>>, vector<8x128xf32>
      tpu.vector_store %arg4[%c0, %c0_5], %9 {strides = array<i32>} : memref<8x128xf32, #tpu.memory_space<vmem>>, vector<8x128xf32>,
      %cst_6 = arith.constant 0.000000e+00 : f32
      %11 = vector.broadcast %cst_6 : f32 to vector<8x128xf32>
      %c0_7 = arith.constant 0 : index
      %c0_8 = arith.constant 0 : index
      %12 = vector.load %arg5[%c0_7, %c0_8] : memref<8x128xf32, #tpu.memory_space<vmem>>, vector<8x128xf32>
      tpu.vector_store %arg5[%c0_7, %c0_8], %11 {strides = array<i32>} : memref<8x128xf32, #tpu.memory_space<vmem>>, vector<8x128xf32>,
    } else {
    }
    %c0_i32_1 = arith.constant 0 : i32
    %3 = arith.cmpi ne, %arg0, %c0_i32_1 : i32
    %4 = arith.extui %3 : i1 to i32
    %c0_i32_2 = arith.constant 0 : i32
    %5 = arith.cmpi ne, %4, %c0_i32_2 : i32
    scf.if %5 {
      %cst = arith.constant 0.000000e+00 : f32
      %9 = vector.broadcast %cst : f32 to vector<16x128xf32>
      %c0_i32_5 = arith.constant 0 : i32
      %c16_i32 = arith.constant 16 : i32
      %10 = arith.muli %c0_i32_5, %c16_i32 : i32
      %11 = tpu.assume_multiple %10, 16 : i32
      %12 = arith.index_cast %11 : i32 to index
      %c0 = arith.constant 0 : index
      %13 = vector.load %arg1[%12, %c0] : memref<16x128xf32, #tpu.memory_space<vmem>>, vector<16x128xf32>
      %14 = arith.addf %9, %13 : vector<16x128xf32>
      %15 = arith.mulf %13, %13 : vector<16x128xf32>
      %16 = arith.addf %9, %15 : vector<16x128xf32>
      %c1_i32 = arith.constant 1 : i32
      %c0_6 = arith.constant 0 : index
      %c0_7 = arith.constant 0 : index
      %17 = vector.load %arg4[%c0_6, %c0_7] : memref<8x128xf32, #tpu.memory_space<vmem>>, vector<8x128xf32>
      %18 = vector.shape_cast %14 : vector<16x128xf32> to vector<2x8x128xf32>
      %cst_8 = arith.constant dense<0.000000e+00> : vector<8x128xf32>
      %19 = vector.multi_reduction <add>, %18, %cst_8 [0] : vector<2x8x128xf32> to vector<8x128xf32>
      %20 = arith.addf %17, %19 : vector<8x128xf32>
      %c0_9 = arith.constant 0 : index
      %c0_10 = arith.constant 0 : index
      %21 = vector.load %arg4[%c0_9, %c0_10] : memref<8x128xf32, #tpu.memory_space<vmem>>, vector<8x128xf32>
      tpu.vector_store %arg4[%c0_9, %c0_10], %20 {strides = array<i32>} : memref<8x128xf32, #tpu.memory_space<vmem>>, vector<8x128xf32>,
      %c0_11 = arith.constant 0 : index
      %c0_12 = arith.constant 0 : index
      %22 = vector.load %arg5[%c0_11, %c0_12] : memref<8x128xf32, #tpu.memory_space<vmem>>, vector<8x128xf32>
      %23 = vector.shape_cast %16 : vector<16x128xf32> to vector<2x8x128xf32>
      %cst_13 = arith.constant dense<0.000000e+00> : vector<8x128xf32>
      %24 = vector.multi_reduction <add>, %23, %cst_13 [0] : vector<2x8x128xf32> to vector<8x128xf32>
      %25 = arith.addf %22, %24 : vector<8x128xf32>
      %c0_14 = arith.constant 0 : index
      %c0_15 = arith.constant 0 : index
      %26 = vector.load %arg5[%c0_14, %c0_15] : memref<8x128xf32, #tpu.memory_space<vmem>>, vector<8x128xf32>
      tpu.vector_store %arg5[%c0_14, %c0_15], %25 {strides = array<i32>} : memref<8x128xf32, #tpu.memory_space<vmem>>, vector<8x128xf32>,
    } else {
    }
    %c0_i32_3 = arith.constant 0 : i32
    %6 = arith.cmpi eq, %arg0, %c0_i32_3 : i32
    %7 = arith.extui %6 : i1 to i32
    %c0_i32_4 = arith.constant 0 : i32
    %8 = arith.cmpi ne, %7, %c0_i32_4 : i32
    scf.if %8 {
      %cst = arith.constant 0.000000e+00 : f32
      %9 = vector.broadcast %cst : f32 to vector<16x128xf32>
      %10 = tpu.iota {dimensions = array<i32: 0>} : vector<16x128xi32>
      %c0_i32_5 = arith.constant 0 : i32
      %c16_i32 = arith.constant 16 : i32
      %11 = arith.muli %c0_i32_5, %c16_i32 : i32
      %12 = tpu.assume_multiple %11, 16 : i32
      %13 = arith.index_cast %12 : i32 to index
      %c0 = arith.constant 0 : index
      %14 = vector.load %arg1[%13, %c0] : memref<16x128xf32, #tpu.memory_space<vmem>>, vector<16x128xf32>
      %c16_i32_6 = arith.constant 16 : i32
      %15 = arith.muli %arg0, %c16_i32_6 : i32
      %c16_i32_7 = arith.constant 16 : i32
      %16 = arith.subi %c16_i32_7, %15 : i32
      %c16_i32_8 = arith.constant 16 : i32
      %17 = arith.muli %c0_i32_5, %c16_i32_8 : i32
      %18 = arith.subi %16, %17 : i32
      %19 = vector.broadcast %18 : i32 to vector<16x128xi32>
      %20 = arith.cmpi slt, %10, %19 : vector<16x128xi32>
      %cst_9 = arith.constant 0.000000e+00 : f32
      %21 = vector.broadcast %cst_9 : f32 to vector<16x128xf32>
      %22 = arith.select %20, %14, %21 : vector<16x128xi1>, vector<16x128xf32>
      %23 = arith.addf %9, %22 : vector<16x128xf32>
      %24 = arith.mulf %22, %22 : vector<16x128xf32>
      %25 = arith.addf %9, %24 : vector<16x128xf32>
      %c1_i32 = arith.constant 1 : i32
      %c0_10 = arith.constant 0 : index
      %c0_11 = arith.constant 0 : index
      %26 = vector.load %arg4[%c0_10, %c0_11] : memref<8x128xf32, #tpu.memory_space<vmem>>, vector<8x128xf32>
      %27 = vector.shape_cast %23 : vector<16x128xf32> to vector<2x8x128xf32>
      %cst_12 = arith.constant dense<0.000000e+00> : vector<8x128xf32>
      %28 = vector.multi_reduction <add>, %27, %cst_12 [0] : vector<2x8x128xf32> to vector<8x128xf32>
      %29 = arith.addf %26, %28 : vector<8x128xf32>
      %c0_13 = arith.constant 0 : index
      %c0_14 = arith.constant 0 : index
      %30 = vector.load %arg4[%c0_13, %c0_14] : memref<8x128xf32, #tpu.memory_space<vmem>>, vector<8x128xf32>
      tpu.vector_store %arg4[%c0_13, %c0_14], %29 {strides = array<i32>} : memref<8x128xf32, #tpu.memory_space<vmem>>, vector<8x128xf32>,
      %c0_15 = arith.constant 0 : index
      %c0_16 = arith.constant 0 : index
      %31 = vector.load %arg5[%c0_15, %c0_16] : memref<8x128xf32, #tpu.memory_space<vmem>>, vector<8x128xf32>
      %32 = vector.shape_cast %25 : vector<16x128xf32> to vector<2x8x128xf32>
      %cst_17 = arith.constant dense<0.000000e+00> : vector<8x128xf32>
      %33 = vector.multi_reduction <add>, %32, %cst_17 [0] : vector<2x8x128xf32> to vector<8x128xf32>
      %34 = arith.addf %31, %33 : vector<8x128xf32>
      %c0_18 = arith.constant 0 : index
      %c0_19 = arith.constant 0 : index
      %35 = vector.load %arg5[%c0_18, %c0_19] : memref<8x128xf32, #tpu.memory_space<vmem>>, vector<8x128xf32>
      tpu.vector_store %arg5[%c0_18, %c0_19], %34 {strides = array<i32>} : memref<8x128xf32, #tpu.memory_space<vmem>>, vector<8x128xf32>,
      %c0_20 = arith.constant 0 : index
      %c0_21 = arith.constant 0 : index
      %36 = vector.load %arg4[%c0_20, %c0_21] : memref<8x128xf32, #tpu.memory_space<vmem>>, vector<8x128xf32>
      %37 = vector.shape_cast %36 : vector<8x128xf32> to vector<1x8x128xf32>
      %cst_22 = arith.constant dense<0.000000e+00> : vector<1xf32>
      %38 = vector.multi_reduction <add>, %37, %cst_22 [1, 2] : vector<1x8x128xf32> to vector<1xf32>
      %39 = vector.shape_cast %38 : vector<1xf32> to vector<1x1x1xf32>
      %40 = vector.extract %39[0, 0, 0] : f32 from vector<1x1x1xf32>
      %c0_23 = arith.constant 0 : index
      %c0_24 = arith.constant 0 : index
      %41 = vector.load %arg5[%c0_23, %c0_24] : memref<8x128xf32, #tpu.memory_space<vmem>>, vector<8x128xf32>
      %42 = vector.shape_cast %41 : vector<8x128xf32> to vector<1x8x128xf32>
      %cst_25 = arith.constant dense<0.000000e+00> : vector<1xf32>
      %43 = vector.multi_reduction <add>, %42, %cst_25 [1, 2] : vector<1x8x128xf32> to vector<1xf32>
      %44 = vector.shape_cast %43 : vector<1xf32> to vector<1x1x1xf32>
      %45 = vector.extract %44[0, 0, 0] : f32 from vector<1x1x1xf32>
      %cst_26 = arith.constant 2.048000e+03 : f32
      %46 = arith.divf %40, %cst_26 : f32
      %47 = arith.mulf %40, %46 : f32
      %48 = arith.subf %45, %47 : f32
      %cst_27 = arith.constant 2.048000e+03 : f32
      %cst_28 = arith.constant 1.000000e+00 : f32
      %49 = arith.subf %cst_27, %cst_28 : f32
      %50 = arith.divf %48, %49 : f32
      %cst_29 = arith.constant 0.000000e+00 : f32
      %51 = arith.maximumf %50, %cst_29 : f32
      %52 = math.sqrt %51 : f32
      %c0_30 = arith.constant 0 : index
      %c0_31 = arith.constant 0 : index
      %53 = memref.load %arg2[%c0_30, %c0_31] : memref<1x1xf32, #tpu.memory_space<smem>>
      memref.store %46, %arg2[%c0_30, %c0_31] : memref<1x1xf32, #tpu.memory_space<smem>>
      %c0_32 = arith.constant 0 : index
      %c0_33 = arith.constant 0 : index
      %54 = memref.load %arg3[%c0_32, %c0_33] : memref<1x1xf32, #tpu.memory_space<smem>>
      memref.store %52, %arg3[%c0_32, %c0_33] : memref<1x1xf32, #tpu.memory_space<smem>>
    } else {
    }
    return
  }
  func.func @transform_0(%arg0: i32) -> (i32, i32) {
    %c0_i32 = arith.constant 0 : i32
    %c0_i32_0 = arith.constant 0 : i32
    return %arg0, %c0_i32 : i32, i32
  }
  func.func @transform_1(%arg0: i32) -> (i32, i32) {
    %c0_i32 = arith.constant 0 : i32
    %c0_i32_0 = arith.constant 0 : i32
    %c0_i32_1 = arith.constant 0 : i32
    return %c0_i32, %c0_i32_0 : i32, i32
  }
  func.func @transform_2(%arg0: i32) -> (i32, i32) {
    %c0_i32 = arith.constant 0 : i32
    %c0_i32_0 = arith.constant 0 : i32
    %c0_i32_1 = arith.constant 0 : i32
    return %c0_i32, %c0_i32_0 : i32, i32
  }
}

</mosaic_0001>

<llo_original>
// kernel: tpu_custom_call.1
$region0: #{tpu_custom_call.1}
  #allocation0 [shape = 'u32[]', space=smem, size = 0x4, offset = 0x4, fixed_abs, tag = 'smem constant byte address 0x4 - core index']
  #allocation1 [shape = 'u32[144,128]{1,0:T(1,128)}', space=vmem, size = 0x12000, scoped, tag = 'internal scratch']
  #allocation2 [shape = 'f32[8,128]{1,0:T(8,128)}', space=vmem, size = 0x1000, scoped, tag = 'scratch operand']
  #allocation3 [shape = 'f32[8,128]{1,0:T(8,128)}', space=vmem, size = 0x1000, scoped, tag = 'scratch operand']
  %s0 = inlined_call_operand.hbm [shape: f32[16,128], index: 0, kind: input, shape index: {}]
  %s1 = inlined_call_operand.hbm [shape: f32[1,1], index: 1, kind: output, shape index: {0}]
  %s2 = inlined_call_operand.hbm [shape: f32[1,1], index: 2, kind: output, shape index: {1}]
  %3 = xla_tuple %s1, %s2
  %s4 = sld [smem:[#allocation0]]
  $region38: #{tpu_custom_call.1} parent=0
    _
  %s6 = ssub.s32 1, %s4
  %s7 = scalar_select 0, %s6, %s4
  $region1: #{tpu_custom_call.1} parent=0
    #allocation4 [shape = 'u8[8192]{0}', space=vmem, size = 0x2000, scoped, tag = 'input window, operand 0, single buffered']
    #allocation5 [shape = 's32[1]{0}', space=sflag, size = 0x4, scoped, tag = 'scoped memory for tpu_custom_call.1']
    #allocation6 [shape = 's32[1]{0}', space=sflag, size = 0x4, scoped, tag = 'scoped memory for tpu_custom_call.1']
    #allocation7 [shape = 'u8[512]{0}', space=smem, size = 0x200, scoped, tag = 'output window, operand 0, single buffered']
    #allocation8 [shape = 'u8[512]{0}', space=smem, size = 0x200, scoped, tag = 'output window, operand 1, single buffered']
    #allocation9 [shape = 's32[1]{0}', space=sflag, size = 0x4, scoped, tag = 'scoped memory for tpu_custom_call.1']
    %8 = vsyncpa [#allocation5], 0
    %9 = vsyncpa [#allocation6], 0
    %10 = vsyncpa [#allocation9], 0
    // Predicated region
    $region2: #{tpu_custom_call.1} parent=1 // pred_check
      _
    $region3: #{tpu_custom_call.1} parent=1 // pred_check_branch
      %12 = sbr.rel (0) target = $region5
    $region4: #{tpu_custom_call.1} parent=1 // pred_region
      %s14 = ssub.s32 256, 256
      %15 = vsyncadd [#allocation5], %s14
      %s16 = sshll.u32 [#allocation4], 4
      %s17 = int_to_ptr.vmem [resolvable:$true] %s16
      %22 = dma.hbm_to_vmem [thread:$0]  %s0, 256, %s17, [#allocation5], 128, 128, 8
    $region5: #{tpu_custom_call.1} parent=1 // pred_fallthru
      _
    // Predicated region
    $region6: #{tpu_custom_call.1} parent=1 // pred_check
      _
    $region7: #{tpu_custom_call.1} parent=1 // pred_check_branch
      %24 = sbr.rel (0) target = $region9
    $region8: #{tpu_custom_call.1} parent=1 // pred_region
      %25 = dma.done [#allocation5], 256
    $region9: #{tpu_custom_call.1} parent=1 // pred_fallthru
      _
    %p26 = scmp.eq.s32.totalorder 0, 0
    // Predicated region
    $region10: #{tpu_custom_call.1} parent=1 // pred_check
      %p27 = pneg %p26
    $region11: #{tpu_custom_call.1} parent=1 // pred_check_branch
      %29 = sbr.rel (%p27) target = $region13
    $region12: #{tpu_custom_call.1} parent=1 // pred_region
      %30 = vst [vmem:[#allocation2] sm:$0xff] 0.0
      %31 = vst [vmem:[#allocation3] sm:$0xff] 0.0
    $region13: #{tpu_custom_call.1} parent=1 // pred_fallthru
      _
    %p32 = scmp.ne.s32.totalorder 0, 0
    // Predicated region
    $region14: #{tpu_custom_call.1} parent=1 // pred_check
      %p33 = pneg %p32
    $region15: #{tpu_custom_call.1} parent=1 // pred_check_branch
      %35 = sbr.rel (%p33) target = $region17
    $region16: #{tpu_custom_call.1} parent=1 // pred_region
      %v36 = vld [vmem:[#allocation4] sm:$0xff]
      %v37 = vld [vmem:[#allocation4 + $0x8] sm:$0xff]
      %v38 = vadd.f32 %v36, 0.0
      %v39 = vadd.f32 %v37, 0.0
      %v40 = vmul.f32 %v36, %v36
      %v41 = vmul.f32 %v37, %v37
      %v42 = vadd.f32 %v40, 0.0
      %v43 = vadd.f32 %v41, 0.0
      %v44 = vld [vmem:[#allocation2] sm:$0xff]
      %v45 = vadd.f32 %v38, %v39
      %v46 = vadd.f32 %v44, %v45
      %47 = vst [vmem:[#allocation2] sm:$0xff] %v46
      %v48 = vld [vmem:[#allocation3] sm:$0xff]
      %v49 = vadd.f32 %v42, %v43
      %v50 = vadd.f32 %v48, %v49
      %51 = vst [vmem:[#allocation3] sm:$0xff] %v50
    $region17: #{tpu_custom_call.1} parent=1 // pred_fallthru
      _
    // Predicated region
    $region18: #{tpu_custom_call.1} parent=1 // pred_check
      %p52 = pneg %p26
    $region19: #{tpu_custom_call.1} parent=1 // pred_check_branch
      %54 = sbr.rel (%p52) target = $region21
    $region20: #{tpu_custom_call.1} parent=1 // pred_region
      %v55 = vlaneseq
      %v56 = vshrl.u32 %v55, 7
      %v57 = vadd.s32 %v56, 8
      %v58 = vld [vmem:[#allocation4] sm:$0xff]
      %v59 = vld [vmem:[#allocation4 + $0x8] sm:$0xff]
      %s60 = smul.u32 0, 16
      %s61 = ssub.s32 16, %s60
      %v62 = vstv %s61
      %vm63 = vcmp.lt.s32.totalorder %v56, %v62
      %vm64 = vcmp.lt.s32.totalorder %v57, %v62
      %v65 = vsel %vm63, %v58, 0.0
      %v66 = vsel %vm64, %v59, 0.0
      %v67 = vadd.f32 %v65, 0.0
      %v68 = vadd.f32 %v66, 0.0
      %v69 = vmul.f32 %v65, %v65
      %v70 = vmul.f32 %v66, %v66
      %v71 = vadd.f32 %v69, 0.0
      %v72 = vadd.f32 %v70, 0.0
      %v73 = vld [vmem:[#allocation2] sm:$0xff]
      %v74 = vadd.f32 %v67, %v68
      %v75 = vadd.f32 %v73, %v74
      %76 = vst [vmem:[#allocation2] sm:$0xff] %v75
      %v77 = vld [vmem:[#allocation3] sm:$0xff]
      %v78 = vadd.f32 %v71, %v72
      %v79 = vadd.f32 %v77, %v78
      %80 = vst [vmem:[#allocation3] sm:$0xff] %v79
      %v81 = vld [vmem:[#allocation2] sm:$0xff]
      %82 = vadd.xlane.f32.xlu0 %v81
      %v83 = vpop.xlane.xlu0 %82
      %v84 = vrot.slane %v83, 4
      %v85 = vadd.f32 %v83, %v84
      %v86 = vrot.slane %v85, 2
      %v87 = vadd.f32 %v85, %v86
      %v88 = vrot.slane %v87, 1
      %v89 = vadd.f32 %v87, %v88
      %s90 = vtos %v89
      %v91 = vld [vmem:[#allocation3] sm:$0xff]
      %92 = vadd.xlane.f32.xlu0 %v91
      %v93 = vpop.xlane.xlu0 %92
      %v94 = vrot.slane %v93, 4
      %v95 = vadd.f32 %v93, %v94
      %v96 = vrot.slane %v95, 2
      %v97 = vadd.f32 %v95, %v96
      %v98 = vrot.slane %v97, 1
      %v99 = vadd.f32 %v97, %v98
      %s100 = vtos %v99
      %v101 = vrcp.pop 2048.0
      %s102 = vtos %v101
      %s103 = smul.f32 %s90, %s102
      %s104 = smul.f32 %s90, %s103
      %s105 = ssub.f32 %s100, %s104
      %v106 = vrcp.pop 2047.0
      %s107 = vtos %v106
      %s108 = smul.f32 %s105, %s107
      %s109 = smax.f32 %s108, 0.0
      %v110 = vstv %s109
      %v111 = vrsqrt.pop %v110
      %v112 = vmul.f32 %v110, %v111
      %vm113 = vcmp.eq.f32.partialorder %v110, inf
      %v114 = vsel %vm113, %v110, %v112
      %vm115 = vcmp.eq.f32.partialorder %v110, 0.0
      %v116 = vand.u32 %v110, 2147483648
      %v117 = vsel %vm115, %v116, %v114
      %s118 = vtos %v117
      %s119 = scalar_lea.smem [#allocation7], 0
      %120 = sst [smem:[%s119]] %s103
      %s121 = scalar_lea.smem [#allocation8], 0
      %122 = sst [smem:[%s121]] %s118
    $region21: #{tpu_custom_call.1} parent=1 // pred_fallthru
      _
    // Predicated region
    $region22: #{tpu_custom_call.1} parent=1 // pred_check
      _
    $region23: #{tpu_custom_call.1} parent=1 // pred_check_branch
      %124 = sbr.rel (0) target = $region25
    $region24: #{tpu_custom_call.1} parent=1 // pred_region
      %s126 = ssub.s32 16, 16
      %127 = vsyncadd [#allocation6], %s126
      %130 = dma.smem_to_hbm [#allocation7], 16, %s1, [#allocation6]
    $region25: #{tpu_custom_call.1} parent=1 // pred_fallthru
      _
    // Predicated region
    $region26: #{tpu_custom_call.1} parent=1 // pred_check
      _
    $region27: #{tpu_custom_call.1} parent=1 // pred_check_branch
      %132 = sbr.rel (0) target = $region29
    $region28: #{tpu_custom_call.1} parent=1 // pred_region
      %s134 = ssub.s32 16, 16
      %135 = vsyncadd [#allocation9], %s134
      %138 = dma.smem_to_hbm [#allocation8], 16, %s2, [#allocation9]
    $region29: #{tpu_custom_call.1} parent=1 // pred_fallthru
      _
    // Predicated region
    $region30: #{tpu_custom_call.1} parent=1 // pred_check
      _
    $region31: #{tpu_custom_call.1} parent=1 // pred_check_branch
      %140 = sbr.rel (0) target = $region33
    $region32: #{tpu_custom_call.1} parent=1 // pred_region
      %141 = dma.done [#allocation6], 16
    $region33: #{tpu_custom_call.1} parent=1 // pred_fallthru
      _
    // Predicated region
    $region34: #{tpu_custom_call.1} parent=1 // pred_check
      _
    $region35: #{tpu_custom_call.1} parent=1 // pred_check_branch
      %143 = sbr.rel (0) target = $region37
    $region36: #{tpu_custom_call.1} parent=1 // pred_region
      %144 = dma.done [#allocation9], 16
    $region37: #{tpu_custom_call.1} parent=1 // pred_fallthru
      _
    %145 = sfence
    %146 = vsyncpa [#allocation5], 1
    %147 = vsyncpa [#allocation6], 1
    %148 = vsyncpa [#allocation9], 1

</llo_original>
